<compile_context>
chip_gen: v5e
topology: v5e:2x2
jax: 0.10.0
libtpu: 0.0.40
codegen_flags: <defaults>
</compile_context>

<pallas_src>
import jax
import jax.numpy as jnp
from jax.experimental import pallas as pl
from jax.experimental.pallas import tpu as pltpu


def _round_up(x, m):
    return (x + m - 1) // m * m


def _mlp_kernel(x_ref, w1_ref, b1_ref, w2_ref, b2_ref, out_ref):
    # Cast activations to the weight compute dtype in-kernel (VPU) -- avoids a
    # separate host-side pad/cast pass over x.
    x = x_ref[...].astype(w1_ref.dtype)
    # hidden = relu(x @ W1 + b1): MXU matmul with f32 accumulation, VPU epilogue.
    h = jnp.dot(x, w1_ref[...], preferred_element_type=jnp.float32)
    h = jnp.maximum(h + b1_ref[...], 0.0)
    # out = relu(hidden @ W2 + b2)
    o = jnp.dot(h.astype(w2_ref.dtype), w2_ref[...],
                preferred_element_type=jnp.float32)
    o = jnp.maximum(o + b2_ref[...], 0.0)
    out_ref[...] = o.astype(out_ref.dtype)


def prepare_params(w1, b1, w2, b2, *, compute_dtype=jnp.bfloat16):
    """Pad + cast weights once (hoisted out of the per-forward path).

    w1: (input_dim*input_range, hidden)   b1: (hidden,)
    w2: (hidden, vocab)                   b2: (vocab,)
    (torch.nn.Linear weights transposed to [in, out]).

    Only hidden and vocab are padded to lane multiples (128); the fc1 input dim
    is left unpadded so activations never need padding in HBM.  Zero padding is
    mathematically inert; padded output columns are sliced off.
    """
    in_feat, hidden = w1.shape
    hidden2, vocab = w2.shape
    assert hidden == hidden2, "fc1 out_features must equal fc2 in_features"

    hid_pad = _round_up(hidden, 128)
    voc_pad = _round_up(vocab, 128)

    w1p = jnp.zeros((in_feat, hid_pad), compute_dtype).at[:, :hidden].set(
        w1.astype(compute_dtype))
    b1p = jnp.zeros((1, hid_pad), jnp.float32).at[0, :hidden].set(
        b1.astype(jnp.float32))
    w2p = jnp.zeros((hid_pad, voc_pad), compute_dtype).at[:hidden, :vocab].set(
        w2.astype(compute_dtype))
    b2p = jnp.zeros((1, voc_pad), jnp.float32).at[0, :vocab].set(
        b2.astype(jnp.float32))

    return {"w1": w1p, "b1": b1p, "w2": w2p, "b2": b2p,
            "in_feat": in_feat, "vocab": vocab}


def _device_vmem_bytes():
    try:
        return int(pltpu.get_tpu_info().vmem_capacity_bytes)
    except Exception:
        return 64 << 20  # conservative fallback: v7x is 64 MiB per TensorCore


def _vmem_footprint(tile_b, tile_n, in_feat, hid_pad, x_bytes, w_bytes,
                    out_bytes, w1_bufs, w2_bufs):
    x_tile = tile_b * in_feat * x_bytes * 2          # double-buffered activations
    out_tile = tile_b * tile_n * out_bytes * 2       # double-buffered output
    w1 = in_feat * hid_pad * w_bytes * w1_bufs
    b1 = hid_pad * 4 * w1_bufs
    w2 = hid_pad * tile_n * w_bytes * w2_bufs
    b2 = tile_n * 4 * w2_bufs
    h = tile_b * hid_pad * 4                         # f32 intermediate
    return x_tile + out_tile + w1 + b1 + w2 + b2 + h


def _choose_tiles(batch_rows, voc_pad, in_feat, hid_pad, x_bytes, w_bytes,
                  out_bytes, vmem_budget):
    # Lane-dense output tile along vocab (multiple of 128 dividing voc_pad).
    tile_n = 128
    for cand in (512, 256, 128):
        if voc_pad % cand == 0:
            tile_n = cand
            break

    # Large batch tile to amortize per-grid-step overhead (cap at 512 rows).
    tile_b = min(batch_rows, 512)

    def fits(tb, tn):
        # Conservative: assume double-buffered weights when checking the budget.
        return _vmem_footprint(tb, tn, in_feat, hid_pad, x_bytes, w_bytes,
                               out_bytes, 2, 2) <= vmem_budget

    while tile_b > 8 and not fits(tile_b, tile_n):
        tile_b = max(8, _round_up(tile_b // 2, 8))
    while tile_n > 128 and not fits(tile_b, tile_n):
        tile_n //= 2

    # Encourage >=2 grid steps so "parallel" axes can shard across both
    # TensorCores on v7x (only when each half still has meaningful work).
    grid_b = pl.cdiv(batch_rows, tile_b)
    grid_n = voc_pad // tile_n
    if grid_b * grid_n == 1:
        if batch_rows >= 256:
            tile_b = _round_up(batch_rows // 2, 8)
        elif tile_n >= 256:
            tile_n //= 2
    return tile_b, tile_n


def outside_com_model_forward(x, params, *, input_dim, input_range,
                              out_dtype=jnp.float32):
    """Pallas implementation of OutsideComModel.forward.

    x: any shape whose total elements are a multiple of input_dim*input_range.
    Returns (batch, vocab_size) in `out_dtype` (float32 by default; bf16 can be
    used on v5e to halve output writeback if downstream permits).
    """
    in_feat = input_dim * input_range
    assert in_feat == params["in_feat"], "params prepared for a different in_feat"
    assert x.size % in_feat == 0, (
        f"input of {x.size} elements cannot be reshaped to (-1, {in_feat})")

    w1p, b1p, w2p, b2p = params["w1"], params["b1"], params["w2"], params["b2"]
    hid_pad = w1p.shape[1]
    voc_pad = w2p.shape[1]
    vocab = params["vocab"]

    x2d = x.reshape(-1, in_feat)
    batch = x2d.shape[0]

    # Batch only needs sublane (8) alignment; pad (<=7 rows) only when needed.
    batch_rows = _round_up(max(batch, 1), 8)
    if batch_rows != batch:
        xk = jnp.zeros((batch_rows, in_feat), x2d.dtype).at[:batch].set(x2d)
    else:
        xk = x2d

    x_bytes = jnp.dtype(xk.dtype).itemsize
    w_bytes = jnp.dtype(w1p.dtype).itemsize
    out_bytes = jnp.dtype(out_dtype).itemsize

    vmem_cap = _device_vmem_bytes()
    tile_b, tile_n = _choose_tiles(batch_rows, voc_pad, in_feat, hid_pad,
                                   x_bytes, w_bytes, out_bytes,
                                   int(vmem_cap * 0.7))

    grid_b = pl.cdiv(batch_rows, tile_b)   # partial trailing block allowed
    grid_n = voc_pad // tile_n
    grid = (grid_b, grid_n)

    def _call(single_buffer_weights):
        w1_bufs = 1 if single_buffer_weights else 2
        # w2/b2 stream over the vocab axis when grid_n > 1 -> keep them
        # double-buffered in that case; otherwise a single copy suffices.
        w2_bufs = 1 if (single_buffer_weights and grid_n == 1) else 2

        def wspec(shape, index_map, bufs):
            if single_buffer_weights:
                return pl.BlockSpec(shape, index_map,
                                    pipeline_mode=pl.Buffered(bufs))
            return pl.BlockSpec(shape, index_map)

        footprint = _vmem_footprint(tile_b, tile_n, in_feat, hid_pad, x_bytes,
                                    w_bytes, out_bytes, w1_bufs, w2_bufs)
        vmem_limit = int(min(vmem_cap,
                             max(32 << 20, footprint * 3 // 2 + (2 << 20))))

        return pl.pallas_call(
            _mlp_kernel,
            out_shape=jax.ShapeDtypeStruct((batch_rows, voc_pad), out_dtype),
            grid_spec=pl.GridSpec(
                grid=grid,
                in_specs=[
                    # activations: tiled along batch, reused across vocab tiles
                    pl.BlockSpec((tile_b, in_feat), lambda i, j: (i, 0)),
                    # fc1 weight/bias: constant block index -> DMA'd once
                    wspec((in_feat, hid_pad), lambda i, j: (0, 0), w1_bufs),
                    wspec((1, hid_pad), lambda i, j: (0, 0), w1_bufs),
                    # fc2 weight/bias: streamed along the vocab grid axis
                    wspec((hid_pad, tile_n), lambda i, j: (0, j), w2_bufs),
                    wspec((1, tile_n), lambda i, j: (0, j), w2_bufs),
                ],
                out_specs=pl.BlockSpec((tile_b, tile_n), lambda i, j: (i, j)),
            ),
            compiler_params=pltpu.CompilerParams(
                dimension_semantics=("parallel", "parallel"),
                vmem_limit_bytes=vmem_limit),
        )(xk, w1p, b1p, w2p, b2p)

    try:
        out_pad = jax.block_until_ready(_call(True))
    except Exception:
        # Fallback if this JAX version rejects Buffered(1): default
        # double-buffering is only a VMEM-footprint pessimization.
        out_pad = _call(False)

    return out_pad[:batch, :vocab]


def _reference(x, w1, b1, w2, b2, input_dim, input_range):
    x2d = x.reshape(-1, input_dim * input_range)
    h = jnp.maximum(x2d @ w1 + b1, 0.0)
    o = jnp.maximum(h @ w2 + b2, 0.0)
    return o


if __name__ == "__main__":
    key = jax.random.PRNGKey(0)

    # --- Test 1: small config consistent with the module's constructor. ---
    input_dim, input_range = 4, 8        # fc1 in_features = 32
    hidden_dim, vocab_size = 32, 16
    batch = 2

    kx, kw1, kb1, kw2, kb2, key = jax.random.split(key, 6)
    x = jax.random.normal(kx, (batch, input_dim, input_range), dtype=jnp.float32)
    w1 = 0.1 * jax.random.normal(kw1, (input_dim * input_range, hidden_dim),
                                 dtype=jnp.float32)
    b1 = 0.1 * jax.random.normal(kb1, (hidden_dim,), dtype=jnp.float32)
    w2 = 0.1 * jax.random.normal(kw2, (hidden_dim, vocab_size), dtype=jnp.float32)
    b2 = 0.1 * jax.random.normal(kb2, (vocab_size,), dtype=jnp.float32)

    ref = _reference(x, w1, b1, w2, b2, input_dim, input_range)

    # f32 compute path: strict numerical check vs reference.
    params_f32 = prepare_params(w1, b1, w2, b2, compute_dtype=jnp.float32)
    out_f32 = jax.block_until_ready(
        outside_com_model_forward(x, params_f32,
                                  input_dim=input_dim, input_range=input_range))
    assert out_f32.shape == (batch, vocab_size)
    assert jnp.allclose(out_f32, ref, atol=1e-5, rtol=1e-5), "f32 path mismatch"

    # bf16-input / f32-accumulate path (recommended in production): loose check
    # (activations are also quantized to bf16, hence the 3e-2 tolerance).
    params_bf16 = prepare_params(w1, b1, w2, b2, compute_dtype=jnp.bfloat16)
    out_bf16 = jax.block_until_ready(
        outside_com_model_forward(x, params_bf16,
                                  input_dim=input_dim, input_range=input_range))
    assert out_bf16.shape == (batch, vocab_size)
    assert jnp.allclose(out_bf16, ref, atol=3e-2, rtol=3e-2), "bf16 path mismatch"

    # --- Test 2: exercises the no-pad batch path and the vocab grid axis. ---
    hidden_dim2, vocab_size2, batch2 = 96, 160, 40
    kx, kw1, kb1, kw2, kb2, key = jax.random.split(key, 6)
    x2 = jax.random.normal(kx, (batch2, input_dim, input_range), dtype=jnp.float32)
    w1b = 0.1 * jax.random.normal(kw1, (input_dim * input_range, hidden_dim2),
                                  dtype=jnp.float32)
    b1b = 0.1 * jax.random.normal(kb1, (hidden_dim2,), dtype=jnp.float32)
    w2b = 0.1 * jax.random.normal(kw2, (hidden_dim2, vocab_size2), dtype=jnp.float32)
    b2b = 0.1 * jax.random.normal(kb2, (vocab_size2,), dtype=jnp.float32)

    ref2 = _reference(x2, w1b, b1b, w2b, b2b, input_dim, input_range)
    params2 = prepare_params(w1b, b1b, w2b, b2b, compute_dtype=jnp.float32)
    out2 = jax.block_until_ready(
        outside_com_model_forward(x2, params2,
                                  input_dim=input_dim, input_range=input_range))
    assert out2.shape == (batch2, vocab_size2)
    assert jnp.allclose(out2, ref2, atol=1e-4, rtol=1e-4), "tiled path mismatch"

    print("KERNEL_OK")
</pallas_src>

<mosaic_0001>
module attributes {stable_mosaic.version = 11 : i64} {
  func.func @_mlp_kernel(%arg0: i32, %arg1: i32, %arg2: memref<8x32xf32, #tpu.memory_space<vmem>>, %arg3: memref<32x128xf32, #tpu.memory_space<vmem>>, %arg4: memref<1x128xf32, #tpu.memory_space<vmem>>, %arg5: memref<128x128xf32, #tpu.memory_space<vmem>>, %arg6: memref<1x128xf32, #tpu.memory_space<vmem>>, %arg7: memref<8x128xf32, #tpu.memory_space<vmem>>) attributes {dimension_semantics = [#tpu.dimension_semantics<parallel>, #tpu.dimension_semantics<parallel>], iteration_bounds = array<i64: 1, 1>, scalar_prefetch = 0 : i64, scratch_operands = 0 : i64, tpu.core_type = #tpu.core_type<tc>, window_params = [{transform_indices = @transform_0, window_bounds = array<i64: 8, 32>}, {pipeline_mode = #tpu.pipeline_mode<synchronous>, transform_indices = @transform_1, window_bounds = array<i64: 32, 128>}, {pipeline_mode = #tpu.pipeline_mode<synchronous>, transform_indices = @transform_2, window_bounds = array<i64: 1, 128>}, {pipeline_mode = #tpu.pipeline_mode<synchronous>, transform_indices = @transform_3, window_bounds = array<i64: 128, 128>}, {pipeline_mode = #tpu.pipeline_mode<synchronous>, transform_indices = @transform_4, window_bounds = array<i64: 1, 128>}, {transform_indices = @transform_5, window_bounds = array<i64: 8, 128>}]} {
    %c0 = arith.constant 0 : index
    %c0_0 = arith.constant 0 : index
    %0 = vector.load %arg2[%c0, %c0_0] : memref<8x32xf32, #tpu.memory_space<vmem>>, vector<8x32xf32>
    %c0_1 = arith.constant 0 : index
    %c0_2 = arith.constant 0 : index
    %1 = vector.load %arg3[%c0_1, %c0_2] : memref<32x128xf32, #tpu.memory_space<vmem>>, vector<32x128xf32>
    %cst = arith.constant dense<0.000000e+00> : vector<8x128xf32>
    %2 = tpu.matmul %0, %1, %cst {dimension_numbers = #tpu.dot_dimension_numbers<[1], [0], [0], [1], [0, 0, 1, 1], [], []>} : vector<8x32xf32>, vector<32x128xf32>, vector<8x128xf32> -> vector<8x128xf32>
    %c0_3 = arith.constant 0 : index
    %c0_4 = arith.constant 0 : index
    %3 = vector.load %arg4[%c0_3, %c0_4] : memref<1x128xf32, #tpu.memory_space<vmem>>, vector<1x128xf32>
    %4 = vector.broadcast %3 : vector<1x128xf32> to vector<8x128xf32>
    %5 = arith.addf %2, %4 : vector<8x128xf32>
    %cst_5 = arith.constant 0.000000e+00 : f32
    %6 = vector.broadcast %cst_5 : f32 to vector<8x128xf32>
    %7 = arith.maximumf %5, %6 : vector<8x128xf32>
    %c0_6 = arith.constant 0 : index
    %c0_7 = arith.constant 0 : index
    %8 = vector.load %arg5[%c0_6, %c0_7] : memref<128x128xf32, #tpu.memory_space<vmem>>, vector<128x128xf32>
    %cst_8 = arith.constant dense<0.000000e+00> : vector<8x128xf32>
    %9 = tpu.matmul %7, %8, %cst_8 {dimension_numbers = #tpu.dot_dimension_numbers<[1], [0], [0], [1], [0, 0, 1, 1], [], []>} : vector<8x128xf32>, vector<128x128xf32>, vector<8x128xf32> -> vector<8x128xf32>
    %c0_9 = arith.constant 0 : index
    %c0_10 = arith.constant 0 : index
    %10 = vector.load %arg6[%c0_9, %c0_10] : memref<1x128xf32, #tpu.memory_space<vmem>>, vector<1x128xf32>
    %11 = vector.broadcast %10 : vector<1x128xf32> to vector<8x128xf32>
    %12 = arith.addf %9, %11 : vector<8x128xf32>
    %cst_11 = arith.constant 0.000000e+00 : f32
    %13 = vector.broadcast %cst_11 : f32 to vector<8x128xf32>
    %14 = arith.maximumf %12, %13 : vector<8x128xf32>
    %c0_12 = arith.constant 0 : index
    %c0_13 = arith.constant 0 : index
    %15 = vector.load %arg7[%c0_12, %c0_13] : memref<8x128xf32, #tpu.memory_space<vmem>>, vector<8x128xf32>
    tpu.vector_store %arg7[%c0_12, %c0_13], %14 {strides = array<i32>} : memref<8x128xf32, #tpu.memory_space<vmem>>, vector<8x128xf32>,
    return
  }
  func.func @transform_0(%arg0: i32, %arg1: i32) -> (i32, i32) {
    %c0_i32 = arith.constant 0 : i32
    %c0_i32_0 = arith.constant 0 : i32
    return %arg0, %c0_i32 : i32, i32
  }
  func.func @transform_1(%arg0: i32, %arg1: i32) -> (i32, i32) {
    %c0_i32 = arith.constant 0 : i32
    %c0_i32_0 = arith.constant 0 : i32
    %c0_i32_1 = arith.constant 0 : i32
    return %c0_i32, %c0_i32_0 : i32, i32
  }
  func.func @transform_2(%arg0: i32, %arg1: i32) -> (i32, i32) {
    %c0_i32 = arith.constant 0 : i32
    %c0_i32_0 = arith.constant 0 : i32
    %c0_i32_1 = arith.constant 0 : i32
    return %c0_i32, %c0_i32_0 : i32, i32
  }
  func.func @transform_3(%arg0: i32, %arg1: i32) -> (i32, i32) {
    %c0_i32 = arith.constant 0 : i32
    %c0_i32_0 = arith.constant 0 : i32
    return %c0_i32, %arg1 : i32, i32
  }
  func.func @transform_4(%arg0: i32, %arg1: i32) -> (i32, i32) {
    %c0_i32 = arith.constant 0 : i32
    %c0_i32_0 = arith.constant 0 : i32
    return %c0_i32, %arg1 : i32, i32
  }
  func.func @transform_5(%arg0: i32, %arg1: i32) -> (i32, i32) {
    %c0_i32 = arith.constant 0 : i32
    return %arg0, %arg1 : i32, i32
  }
}

module attributes {stable_mosaic.version = 11 : i64} {
  func.func @_mlp_kernel(%arg0: i32, %arg1: i32, %arg2: memref<8x32xf32, #tpu.memory_space<vmem>>, %arg3: memref<32x128xf32, #tpu.memory_space<vmem>>, %arg4: memref<1x128xf32, #tpu.memory_space<vmem>>, %arg5: memref<128x128xf32, #tpu.memory_space<vmem>>, %arg6: memref<1x128xf32, #tpu.memory_space<vmem>>, %arg7: memref<8x128xf32, #tpu.memory_space<vmem>>) attributes {dimension_semantics = [#tpu.dimension_semantics<parallel>, #tpu.dimension_semantics<parallel>], iteration_bounds = array<i64: 1, 1>, scalar_prefetch = 0 : i64, scratch_operands = 0 : i64, tpu.core_type = #tpu.core_type<tc>, window_params = [{transform_indices = @transform_0, window_bounds = array<i64: 8, 32>}, {pipeline_mode = #tpu.pipeline_mode<synchronous>, transform_indices = @transform_1, window_bounds = array<i64: 32, 128>}, {pipeline_mode = #tpu.pipeline_mode<synchronous>, transform_indices = @transform_2, window_bounds = array<i64: 1, 128>}, {transform_indices = @transform_3, window_bounds = array<i64: 128, 128>}, {transform_indices = @transform_4, window_bounds = array<i64: 1, 128>}, {transform_indices = @transform_5, window_bounds = array<i64: 8, 128>}]} {
    %c0 = arith.constant 0 : index
    %c0_0 = arith.constant 0 : index
    %0 = vector.load %arg2[%c0, %c0_0] : memref<8x32xf32, #tpu.memory_space<vmem>>, vector<8x32xf32>
    %c0_1 = arith.constant 0 : index
    %c0_2 = arith.constant 0 : index
    %1 = vector.load %arg3[%c0_1, %c0_2] : memref<32x128xf32, #tpu.memory_space<vmem>>, vector<32x128xf32>
    %cst = arith.constant dense<0.000000e+00> : vector<8x128xf32>
    %2 = tpu.matmul %0, %1, %cst {dimension_numbers = #tpu.dot_dimension_numbers<[1], [0], [0], [1], [0, 0, 1, 1], [], []>} : vector<8x32xf32>, vector<32x128xf32>, vector<8x128xf32> -> vector<8x128xf32>
    %c0_3 = arith.constant 0 : index
    %c0_4 = arith.constant 0 : index
    %3 = vector.load %arg4[%c0_3, %c0_4] : memref<1x128xf32, #tpu.memory_space<vmem>>, vector<1x128xf32>
    %4 = vector.broadcast %3 : vector<1x128xf32> to vector<8x128xf32>
    %5 = arith.addf %2, %4 : vector<8x128xf32>
    %cst_5 = arith.constant 0.000000e+00 : f32
    %6 = vector.broadcast %cst_5 : f32 to vector<8x128xf32>
    %7 = arith.maximumf %5, %6 : vector<8x128xf32>
    %c0_6 = arith.constant 0 : index
    %c0_7 = arith.constant 0 : index
    %8 = vector.load %arg5[%c0_6, %c0_7] : memref<128x128xf32, #tpu.memory_space<vmem>>, vector<128x128xf32>
    %cst_8 = arith.constant dense<0.000000e+00> : vector<8x128xf32>
    %9 = tpu.matmul %7, %8, %cst_8 {dimension_numbers = #tpu.dot_dimension_numbers<[1], [0], [0], [1], [0, 0, 1, 1], [], []>} : vector<8x128xf32>, vector<128x128xf32>, vector<8x128xf32> -> vector<8x128xf32>
    %c0_9 = arith.constant 0 : index
    %c0_10 = arith.constant 0 : index
    %10 = vector.load %arg6[%c0_9, %c0_10] : memref<1x128xf32, #tpu.memory_space<vmem>>, vector<1x128xf32>
    %11 = vector.broadcast %10 : vector<1x128xf32> to vector<8x128xf32>
    %12 = arith.addf %9, %11 : vector<8x128xf32>
    %cst_11 = arith.constant 0.000000e+00 : f32
    %13 = vector.broadcast %cst_11 : f32 to vector<8x128xf32>
    %14 = arith.maximumf %12, %13 : vector<8x128xf32>
    %c0_12 = arith.constant 0 : index
    %c0_13 = arith.constant 0 : index
    %15 = vector.load %arg7[%c0_12, %c0_13] : memref<8x128xf32, #tpu.memory_space<vmem>>, vector<8x128xf32>
    tpu.vector_store %arg7[%c0_12, %c0_13], %14 {strides = array<i32>} : memref<8x128xf32, #tpu.memory_space<vmem>>, vector<8x128xf32>,
    return
  }
  func.func @transform_0(%arg0: i32, %arg1: i32) -> (i32, i32) {
    %c0_i32 = arith.constant 0 : i32
    %c0_i32_0 = arith.constant 0 : i32
    return %arg0, %c0_i32 : i32, i32
  }
  func.func @transform_1(%arg0: i32, %arg1: i32) -> (i32, i32) {
    %c0_i32 = arith.constant 0 : i32
    %c0_i32_0 = arith.constant 0 : i32
    %c0_i32_1 = arith.constant 0 : i32
    return %c0_i32, %c0_i32_0 : i32, i32
  }
  func.func @transform_2(%arg0: i32, %arg1: i32) -> (i32, i32) {
    %c0_i32 = arith.constant 0 : i32
    %c0_i32_0 = arith.constant 0 : i32
    %c0_i32_1 = arith.constant 0 : i32
    return %c0_i32, %c0_i32_0 : i32, i32
  }
  func.func @transform_3(%arg0: i32, %arg1: i32) -> (i32, i32) {
    %c0_i32 = arith.constant 0 : i32
    %c0_i32_0 = arith.constant 0 : i32
    return %c0_i32, %arg1 : i32, i32
  }
  func.func @transform_4(%arg0: i32, %arg1: i32) -> (i32, i32) {
    %c0_i32 = arith.constant 0 : i32
    %c0_i32_0 = arith.constant 0 : i32
    return %c0_i32, %arg1 : i32, i32
  }
  func.func @transform_5(%arg0: i32, %arg1: i32) -> (i32, i32) {
    %c0_i32 = arith.constant 0 : i32
    return %arg0, %arg1 : i32, i32
  }
}

</mosaic_0001>

<llo_original>
// kernel: tpu_custom_call.1
$region0: #{tpu_custom_call.1}
  #allocation0 [shape = 'u32[]', space=smem, size = 0x4, offset = 0x4, fixed_abs, tag = 'smem constant byte address 0x4 - core index']
  #allocation1 [shape = 'u32[72,128]{1,0:T(1,128)}', space=vmem, size = 0x9000, scoped, tag = 'internal scratch']
  %s0 = inlined_call_operand.hbm [shape: f32[8,32], index: 0, kind: input, shape index: {}]
  %s1 = inlined_call_operand.hbm [shape: f32[32,128], index: 1, kind: input, shape index: {}]
  %s2 = inlined_call_operand.vmem [shape: f32[1,128], index: 2, kind: input, shape index: {}]
  %s3 = inlined_call_operand.hbm [shape: f32[128,128], index: 3, kind: input, shape index: {}]
  %s4 = inlined_call_operand.vmem [shape: f32[1,128], index: 4, kind: input, shape index: {}]
  %s5 = inlined_call_operand.hbm [shape: f32[8,128], index: 5, kind: output, shape index: {}]
  %s6 = sld [smem:[#allocation0]]
  $region42: #{tpu_custom_call.1} parent=0
    _
  %s8 = ssub.s32 1, %s6
  %s9 = scalar_select 0, %s8, %s6
  $region1: #{tpu_custom_call.1} parent=0
    #allocation2 [shape = 'u8[4096]{0}', space=vmem, size = 0x1000, scoped, tag = 'input window, operand 0, single buffered']
    #allocation3 [shape = 's32[1]{0}', space=sflag, size = 0x4, scoped, tag = 'scoped memory for tpu_custom_call.1']
    #allocation4 [shape = 's32[1]{0}', space=sflag, size = 0x4, scoped, tag = 'scoped memory for tpu_custom_call.1']
    #allocation5 [shape = 'u8[16384]{0}', space=vmem, size = 0x4000, scoped, tag = 'input window, operand 1, single buffered']
    #allocation6 [shape = 's32[1]{0}', space=sflag, size = 0x4, scoped, tag = 'scoped memory for tpu_custom_call.1']
    #allocation7 [shape = 'u8[65536]{0}', space=vmem, size = 0x10000, scoped, tag = 'input window, operand 3, single buffered']
    #allocation8 [shape = 'u8[4096]{0}', space=vmem, size = 0x1000, scoped, tag = 'output window, operand 0, single buffered']
    %10 = vsyncpa [#allocation3], 0
    %11 = vsyncpa [#allocation6], 0
    %12 = vsyncpa [#allocation4], 0
    // Predicated region
    $region2: #{tpu_custom_call.1} parent=1 // pred_check
      _
    $region3: #{tpu_custom_call.1} parent=1 // pred_check_branch
      %14 = sbr.rel (0) target = $region5
    $region4: #{tpu_custom_call.1} parent=1 // pred_region
      %16 = vsyncadd [#allocation3], 0
      %s18 = sshll.u32 %s0, 4
      %s19 = int_to_ptr.hbm [resolvable:$true] %s18
      %s20 = sshll.u32 [#allocation2], 4
      %s21 = int_to_ptr.vmem [resolvable:$true] %s20
      %23 = dma.hbm_to_vmem [thread:$0]  %s19, 128, %s21, [#allocation3]
    $region5: #{tpu_custom_call.1} parent=1 // pred_fallthru
      _
    // Predicated region
    $region6: #{tpu_custom_call.1} parent=1 // pred_check
      _
    $region7: #{tpu_custom_call.1} parent=1 // pred_check_branch
      %25 = sbr.rel (0) target = $region9
    $region8: #{tpu_custom_call.1} parent=1 // pred_region
      %27 = vsyncadd [#allocation6], 0
      %s28 = sshll.u32 %s1, 4
      %s29 = int_to_ptr.hbm [resolvable:$true] %s28
      %s30 = sshll.u32 [#allocation5], 4
      %s31 = int_to_ptr.vmem [resolvable:$true] %s30
      %36 = dma.hbm_to_vmem [thread:$0]  %s29, 512, %s31, [#allocation6], 128, 128, 8
    $region9: #{tpu_custom_call.1} parent=1 // pred_fallthru
      _
    // Predicated region
    $region10: #{tpu_custom_call.1} parent=1 // pred_check
      _
    $region11: #{tpu_custom_call.1} parent=1 // pred_check_branch
      %38 = sbr.rel (0) target = $region13
    $region12: #{tpu_custom_call.1} parent=1 // pred_region
      _
    $region13: #{tpu_custom_call.1} parent=1 // pred_fallthru
      _
    // Predicated region
    $region14: #{tpu_custom_call.1} parent=1 // pred_check
      _
    $region15: #{tpu_custom_call.1} parent=1 // pred_check_branch
      %40 = sbr.rel (0) target = $region17
    $region16: #{tpu_custom_call.1} parent=1 // pred_region
      %42 = vsyncadd [#allocation6], 0
      %s43 = sshll.u32 %s3, 4
      %s44 = int_to_ptr.hbm [resolvable:$true] %s43
      %s45 = sshll.u32 [#allocation7], 4
      %s46 = int_to_ptr.vmem [resolvable:$true] %s45
      %51 = dma.hbm_to_vmem [thread:$0]  %s44, 2048, %s46, [#allocation6], 128, 128, 8
    $region17: #{tpu_custom_call.1} parent=1 // pred_fallthru
      _
    // Predicated region
    $region18: #{tpu_custom_call.1} parent=1 // pred_check
      _
    $region19: #{tpu_custom_call.1} parent=1 // pred_check_branch
      %53 = sbr.rel (0) target = $region21
    $region20: #{tpu_custom_call.1} parent=1 // pred_region
      _
    $region21: #{tpu_custom_call.1} parent=1 // pred_fallthru
      _
    // Predicated region
    $region22: #{tpu_custom_call.1} parent=1 // pred_check
      _
    $region23: #{tpu_custom_call.1} parent=1 // pred_check_branch
      %55 = sbr.rel (0) target = $region25
    $region24: #{tpu_custom_call.1} parent=1 // pred_region
      %57 = dma.done [#allocation3], 128
    $region25: #{tpu_custom_call.1} parent=1 // pred_fallthru
      _
    // Predicated region
    $region26: #{tpu_custom_call.1} parent=1 // pred_check
      _
    $region27: #{tpu_custom_call.1} parent=1 // pred_check_branch
      %59 = sbr.rel (0) target = $region29
    $region28: #{tpu_custom_call.1} parent=1 // pred_region
      %61 = dma.done [#allocation6], 512
    $region29: #{tpu_custom_call.1} parent=1 // pred_fallthru
      _
    // Predicated region
    $region30: #{tpu_custom_call.1} parent=1 // pred_check
      _
    $region31: #{tpu_custom_call.1} parent=1 // pred_check_branch
      %63 = sbr.rel (0) target = $region33
    $region32: #{tpu_custom_call.1} parent=1 // pred_region
      %65 = dma.done [#allocation6], 2048
    $region33: #{tpu_custom_call.1} parent=1 // pred_fallthru
      _
    %v66 = vld [vmem:[#allocation2] sm:$0xff]
    %v67 = vld [vmem:[#allocation5] sm:$0xff]
    %v68 = vld [vmem:[#allocation5 + $0x8] sm:$0xff]
    %v69 = vld [vmem:[#allocation5 + $0x10] sm:$0xff]
    %v70 = vld [vmem:[#allocation5 + $0x18] sm:$0xff]
    %v71 = vld [vmem:[%s2] sm:$0x1]
    %v73 = vperm.slane %v71, 0
    %vm75 = vcmask 261120
    %v77 = vsel %vm75, %v66, 0
    %79 = vmatpush.msra.mxu0 0.0
    %80 = vmatpush.msra.mxu0 0.0
    %81 = vmatpush.msra.mxu0 0.0
    %82 = vmatpush.msra.mxu0 0.0
    %83 = vmatpush.msra.mxu0 0.0
    %84 = vmatpush.msra.mxu0 0.0
    %85 = vmatpush.msra.mxu0 0.0
    %86 = vmatpush.msra.mxu0 0.0
    %87 = vmatpush.msra.mxu0 0.0
    %88 = vmatpush.msra.mxu0 0.0
    %89 = vmatpush.msra.mxu0 0.0
    %90 = vmatpush.msra.mxu0 0.0
    %91 = vmatpush.msra.mxu0 %v70
    %92 = vmatpush.msra.mxu0 %v69
    %93 = vmatpush.msra.mxu0 %v68
    %94 = vmatpush.msra.mxu0 %v67
    %95 = vmatmul.f32.gmra.mxu0 %v77
    %v96 = vpop.f32.mrf.mxu0
    %v97 = vadd.f32 %v73, %v96
    %98 = vdwg.mxu0
    %v99 = vmax.f32 %v97, 0.0
    %v100 = vld [vmem:[#allocation7] sm:$0xff]
    %v101 = vld [vmem:[#allocation7 + $0x8] sm:$0xff]
    %v102 = vld [vmem:[#allocation7 + $0x10] sm:$0xff]
    %v103 = vld [vmem:[#allocation7 + $0x18] sm:$0xff]
    %v104 = vld [vmem:[#allocation7 + $0x20] sm:$0xff]
    %v105 = vld [vmem:[#allocation7 + $0x28] sm:$0xff]
    %v106 = vld [vmem:[#allocation7 + $0x30] sm:$0xff]
    %v107 = vld [vmem:[#allocation7 + $0x38] sm:$0xff]
    %v108 = vld [vmem:[#allocation7 + $0x40] sm:$0xff]
    %v109 = vld [vmem:[#allocation7 + $0x48] sm:$0xff]
    %v110 = vld [vmem:[#allocation7 + $0x50] sm:$0xff]
    %v111 = vld [vmem:[#allocation7 + $0x58] sm:$0xff]
    %v112 = vld [vmem:[#allocation7 + $0x60] sm:$0xff]
    %v113 = vld [vmem:[#allocation7 + $0x68] sm:$0xff]
    %v114 = vld [vmem:[#allocation7 + $0x70] sm:$0xff]
    %v115 = vld [vmem:[#allocation7 + $0x78] sm:$0xff]
    %v116 = vld [vmem:[%s4] sm:$0x1]
    %v118 = vperm.slane %v116, 0
    %120 = vmatpush.msra.mxu0 %v115
    %121 = vmatpush.msra.mxu0 %v114
    %122 = vmatpush.msra.mxu0 %v113
    %123 = vmatpush.msra.mxu0 %v112
    %124 = vmatpush.msra.mxu0 %v111
    %125 = vmatpush.msra.mxu0 %v110
    %126 = vmatpush.msra.mxu0 %v109
    %127 = vmatpush.msra.mxu0 %v108
    %128 = vmatpush.msra.mxu0 %v107
    %129 = vmatpush.msra.mxu0 %v106
    %130 = vmatpush.msra.mxu0 %v105
    %131 = vmatpush.msra.mxu0 %v104
    %132 = vmatpush.msra.mxu0 %v103
    %133 = vmatpush.msra.mxu0 %v102
    %134 = vmatpush.msra.mxu0 %v101
    %135 = vmatpush.msra.mxu0 %v100
    %136 = vmatmul.f32.gmra.mxu0 %v99
    %v137 = vpop.f32.mrf.mxu0
    %v138 = vadd.f32 %v118, %v137
    %139 = vdwg.mxu0
    %v140 = vmax.f32 %v138, 0.0
    %141 = vst [vmem:[#allocation8] sm:$0xff] %v140
    // Predicated region
    $region34: #{tpu_custom_call.1} parent=1 // pred_check
      _
    $region35: #{tpu_custom_call.1} parent=1 // pred_check_branch
      %143 = sbr.rel (0) target = $region37
    $region36: #{tpu_custom_call.1} parent=1 // pred_region
      %145 = vsyncadd [#allocation4], 0
      %s147 = sshll.u32 [#allocation8], 4
      %s148 = int_to_ptr.vmem [resolvable:$true] %s147
      %s149 = sshll.u32 %s5, 4
      %s150 = int_to_ptr.hbm [resolvable:$true] %s149
      %152 = dma.vmem_to_hbm [thread:$0]  %s148, 128, %s150, [#allocation4]
    $region37: #{tpu_custom_call.1} parent=1 // pred_fallthru
      _
    // Predicated region
    $region38: #{tpu_custom_call.1} parent=1 // pred_check
      _
    $region39: #{tpu_custom_call.1} parent=1 // pred_check_branch
      %154 = sbr.rel (0) target = $region41
    $region40: #{tpu_custom_call.1} parent=1 // pred_region
      %156 = dma.done [#allocation4], 128
    $region41: #{tpu_custom_call.1} parent=1 // pred_fallthru
      _
    %157 = vsyncpa [#allocation3], 1
    %158 = vsyncpa [#allocation6], 1
    %159 = vsyncpa [#allocation4], 1

// kernel: tpu_custom_call.1
$region0: #{tpu_custom_call.1}
  #allocation0 [shape = 'u32[]', space=smem, size = 0x4, offset = 0x4, fixed_abs, tag = 'smem constant byte address 0x4 - core index']
  #allocation1 [shape = 'u32[72,128]{1,0:T(1,128)}', space=vmem, size = 0x9000, scoped, tag = 'internal scratch']
  %s0 = inlined_call_operand.hbm [shape: f32[8,32], index: 0, kind: input, shape index: {}]
  %s1 = inlined_call_operand.hbm [shape: f32[32,128], index: 1, kind: input, shape index: {}]
  %s2 = inlined_call_operand.vmem [shape: f32[1,128], index: 2, kind: input, shape index: {}]
  %s3 = inlined_call_operand.hbm [shape: f32[128,128], index: 3, kind: input, shape index: {}]
  %s4 = inlined_call_operand.vmem [shape: f32[1,128], index: 4, kind: input, shape index: {}]
  %s5 = inlined_call_operand.hbm [shape: f32[8,128], index: 5, kind: output, shape index: {}]
  %s6 = sld [smem:[#allocation0]]
  $region42: #{tpu_custom_call.1} parent=0
    _
  %s8 = ssub.s32 1, %s6
  %s9 = scalar_select 0, %s8, %s6
  $region1: #{tpu_custom_call.1} parent=0
    #allocation2 [shape = 'u8[4096]{0}', space=vmem, size = 0x1000, scoped, tag = 'input window, operand 0, single buffered']
    #allocation3 [shape = 's32[1]{0}', space=sflag, size = 0x4, scoped, tag = 'scoped memory for tpu_custom_call.1']
    #allocation4 [shape = 's32[1]{0}', space=sflag, size = 0x4, scoped, tag = 'scoped memory for tpu_custom_call.1']
    #allocation5 [shape = 'u8[16384]{0}', space=vmem, size = 0x4000, scoped, tag = 'input window, operand 1, single buffered']
    #allocation6 [shape = 's32[1]{0}', space=sflag, size = 0x4, scoped, tag = 'scoped memory for tpu_custom_call.1']
    #allocation7 [shape = 'u8[65536]{0}', space=vmem, size = 0x10000, scoped, tag = 'input window, operand 3, single buffered']
    #allocation8 [shape = 'u8[4096]{0}', space=vmem, size = 0x1000, scoped, tag = 'output window, operand 0, single buffered']
    %10 = vsyncpa [#allocation3], 0
    %11 = vsyncpa [#allocation6], 0
    %12 = vsyncpa [#allocation4], 0
    // Predicated region
    $region2: #{tpu_custom_call.1} parent=1 // pred_check
      _
    $region3: #{tpu_custom_call.1} parent=1 // pred_check_branch
      %14 = sbr.rel (0) target = $region5
    $region4: #{tpu_custom_call.1} parent=1 // pred_region
      %16 = vsyncadd [#allocation3], 0
      %s18 = sshll.u32 %s0, 4
      %s19 = int_to_ptr.hbm [resolvable:$true] %s18
      %s20 = sshll.u32 [#allocation2], 4
      %s21 = int_to_ptr.vmem [resolvable:$true] %s20
      %23 = dma.hbm_to_vmem [thread:$0]  %s19, 128, %s21, [#allocation3]
    $region5: #{tpu_custom_call.1} parent=1 // pred_fallthru
      _
    // Predicated region
    $region6: #{tpu_custom_call.1} parent=1 // pred_check
      _
    $region7: #{tpu_custom_call.1} parent=1 // pred_check_branch
      %25 = sbr.rel (0) target = $region9
    $region8: #{tpu_custom_call.1} parent=1 // pred_region
      %27 = vsyncadd [#allocation6], 0
      %s28 = sshll.u32 %s1, 4
      %s29 = int_to_ptr.hbm [resolvable:$true] %s28
      %s30 = sshll.u32 [#allocation5], 4
      %s31 = int_to_ptr.vmem [resolvable:$true] %s30
      %36 = dma.hbm_to_vmem [thread:$0]  %s29, 512, %s31, [#allocation6], 128, 128, 8
    $region9: #{tpu_custom_call.1} parent=1 // pred_fallthru
      _
    // Predicated region
    $region10: #{tpu_custom_call.1} parent=1 // pred_check
      _
    $region11: #{tpu_custom_call.1} parent=1 // pred_check_branch
      %38 = sbr.rel (0) target = $region13
    $region12: #{tpu_custom_call.1} parent=1 // pred_region
      _
    $region13: #{tpu_custom_call.1} parent=1 // pred_fallthru
      _
    // Predicated region
    $region14: #{tpu_custom_call.1} parent=1 // pred_check
      _
    $region15: #{tpu_custom_call.1} parent=1 // pred_check_branch
      %40 = sbr.rel (0) target = $region17
    $region16: #{tpu_custom_call.1} parent=1 // pred_region
      %42 = vsyncadd [#allocation6], 0
      %s43 = sshll.u32 %s3, 4
      %s44 = int_to_ptr.hbm [resolvable:$true] %s43
      %s45 = sshll.u32 [#allocation7], 4
      %s46 = int_to_ptr.vmem [resolvable:$true] %s45
      %51 = dma.hbm_to_vmem [thread:$0]  %s44, 2048, %s46, [#allocation6], 128, 128, 8
    $region17: #{tpu_custom_call.1} parent=1 // pred_fallthru
      _
    // Predicated region
    $region18: #{tpu_custom_call.1} parent=1 // pred_check
      _
    $region19: #{tpu_custom_call.1} parent=1 // pred_check_branch
      %53 = sbr.rel (0) target = $region21
    $region20: #{tpu_custom_call.1} parent=1 // pred_region
      _
    $region21: #{tpu_custom_call.1} parent=1 // pred_fallthru
      _
    // Predicated region
    $region22: #{tpu_custom_call.1} parent=1 // pred_check
      _
    $region23: #{tpu_custom_call.1} parent=1 // pred_check_branch
      %55 = sbr.rel (0) target = $region25
    $region24: #{tpu_custom_call.1} parent=1 // pred_region
      %57 = dma.done [#allocation3], 128
    $region25: #{tpu_custom_call.1} parent=1 // pred_fallthru
      _
    // Predicated region
    $region26: #{tpu_custom_call.1} parent=1 // pred_check
      _
    $region27: #{tpu_custom_call.1} parent=1 // pred_check_branch
      %59 = sbr.rel (0) target = $region29
    $region28: #{tpu_custom_call.1} parent=1 // pred_region
      %61 = dma.done [#allocation6], 512
    $region29: #{tpu_custom_call.1} parent=1 // pred_fallthru
      _
    // Predicated region
    $region30: #{tpu_custom_call.1} parent=1 // pred_check
      _
    $region31: #{tpu_custom_call.1} parent=1 // pred_check_branch
      %63 = sbr.rel (0) target = $region33
    $region32: #{tpu_custom_call.1} parent=1 // pred_region
      %65 = dma.done [#allocation6], 2048
    $region33: #{tpu_custom_call.1} parent=1 // pred_fallthru
      _
    %v66 = vld [vmem:[#allocation2] sm:$0xff]
    %v67 = vld [vmem:[#allocation5] sm:$0xff]
    %v68 = vld [vmem:[#allocation5 + $0x8] sm:$0xff]
    %v69 = vld [vmem:[#allocation5 + $0x10] sm:$0xff]
    %v70 = vld [vmem:[#allocation5 + $0x18] sm:$0xff]
    %v71 = vld [vmem:[%s2] sm:$0x1]
    %v73 = vperm.slane %v71, 0
    %vm75 = vcmask 261120
    %v77 = vsel %vm75, %v66, 0
    %79 = vmatpush.msra.mxu0 0.0
    %80 = vmatpush.msra.mxu0 0.0
    %81 = vmatpush.msra.mxu0 0.0
    %82 = vmatpush.msra.mxu0 0.0
    %83 = vmatpush.msra.mxu0 0.0
    %84 = vmatpush.msra.mxu0 0.0
    %85 = vmatpush.msra.mxu0 0.0
    %86 = vmatpush.msra.mxu0 0.0
    %87 = vmatpush.msra.mxu0 0.0
    %88 = vmatpush.msra.mxu0 0.0
    %89 = vmatpush.msra.mxu0 0.0
    %90 = vmatpush.msra.mxu0 0.0
    %91 = vmatpush.msra.mxu0 %v70
    %92 = vmatpush.msra.mxu0 %v69
    %93 = vmatpush.msra.mxu0 %v68
    %94 = vmatpush.msra.mxu0 %v67
    %95 = vmatmul.f32.gmra.mxu0 %v77
    %v96 = vpop.f32.mrf.mxu0
    %v97 = vadd.f32 %v73, %v96
    %98 = vdwg.mxu0
    %v99 = vmax.f32 %v97, 0.0
    %v100 = vld [vmem:[#allocation7] sm:$0xff]
    %v101 = vld [vmem:[#allocation7 + $0x8] sm:$0xff]
    %v102 = vld [vmem:[#allocation7 + $0x10] sm:$0xff]
    %v103 = vld [vmem:[#allocation7 + $0x18] sm:$0xff]
    %v104 = vld [vmem:[#allocation7 + $0x20] sm:$0xff]
    %v105 = vld [vmem:[#allocation7 + $0x28] sm:$0xff]
    %v106 = vld [vmem:[#allocation7 + $0x30] sm:$0xff]
    %v107 = vld [vmem:[#allocation7 + $0x38] sm:$0xff]
    %v108 = vld [vmem:[#allocation7 + $0x40] sm:$0xff]
    %v109 = vld [vmem:[#allocation7 + $0x48] sm:$0xff]
    %v110 = vld [vmem:[#allocation7 + $0x50] sm:$0xff]
    %v111 = vld [vmem:[#allocation7 + $0x58] sm:$0xff]
    %v112 = vld [vmem:[#allocation7 + $0x60] sm:$0xff]
    %v113 = vld [vmem:[#allocation7 + $0x68] sm:$0xff]
    %v114 = vld [vmem:[#allocation7 + $0x70] sm:$0xff]
    %v115 = vld [vmem:[#allocation7 + $0x78] sm:$0xff]
    %v116 = vld [vmem:[%s4] sm:$0x1]
    %v118 = vperm.slane %v116, 0
    %120 = vmatpush.msra.mxu0 %v115
    %121 = vmatpush.msra.mxu0 %v114
    %122 = vmatpush.msra.mxu0 %v113
    %123 = vmatpush.msra.mxu0 %v112
    %124 = vmatpush.msra.mxu0 %v111
    %125 = vmatpush.msra.mxu0 %v110
    %126 = vmatpush.msra.mxu0 %v109
    %127 = vmatpush.msra.mxu0 %v108
    %128 = vmatpush.msra.mxu0 %v107
    %129 = vmatpush.msra.mxu0 %v106
    %130 = vmatpush.msra.mxu0 %v105
    %131 = vmatpush.msra.mxu0 %v104
    %132 = vmatpush.msra.mxu0 %v103
    %133 = vmatpush.msra.mxu0 %v102
    %134 = vmatpush.msra.mxu0 %v101
    %135 = vmatpush.msra.mxu0 %v100
    %136 = vmatmul.f32.gmra.mxu0 %v99
    %v137 = vpop.f32.mrf.mxu0
    %v138 = vadd.f32 %v118, %v137
    %139 = vdwg.mxu0
    %v140 = vmax.f32 %v138, 0.0
    %141 = vst [vmem:[#allocation8] sm:$0xff] %v140
    // Predicated region
    $region34: #{tpu_custom_call.1} parent=1 // pred_check
      _
    $region35: #{tpu_custom_call.1} parent=1 // pred_check_branch
      %143 = sbr.rel (0) target = $region37
    $region36: #{tpu_custom_call.1} parent=1 // pred_region
      %145 = vsyncadd [#allocation4], 0
      %s147 = sshll.u32 [#allocation8], 4
      %s148 = int_to_ptr.vmem [resolvable:$true] %s147
      %s149 = sshll.u32 %s5, 4
      %s150 = int_to_ptr.hbm [resolvable:$true] %s149
      %152 = dma.vmem_to_hbm [thread:$0]  %s148, 128, %s150, [#allocation4]
    $region37: #{tpu_custom_call.1} parent=1 // pred_fallthru
      _
    // Predicated region
    $region38: #{tpu_custom_call.1} parent=1 // pred_check
      _
    $region39: #{tpu_custom_call.1} parent=1 // pred_check_branch
      %154 = sbr.rel (0) target = $region41
    $region40: #{tpu_custom_call.1} parent=1 // pred_region
      %156 = dma.done [#allocation4], 128
    $region41: #{tpu_custom_call.1} parent=1 // pred_fallthru
      _
    %157 = vsyncpa [#allocation3], 1
    %158 = vsyncpa [#allocation6], 1
    %159 = vsyncpa [#allocation4], 1

</llo_original>
